<compile_context>
chip_gen: v6e
topology: v6e:2x2x1
jax: 0.10.0
libtpu: 0.0.40
codegen_flags: <defaults>
</compile_context>

<pallas_src>
import functools

import jax
import jax.numpy as jnp
import numpy as np
from jax.experimental import pallas as pl
from jax.experimental.pallas import tpu as pltpu


def _round_up(a, m):
    return (a + m - 1) // m * m


# ---------------------------------------------------------------------------
# Phase 1: scale = (B*L) / sum(block_mask) from the (B, L) random field.
# ---------------------------------------------------------------------------
def _dropblock_scale_kernel(u_ref, scale_ref, acc_ref, *,
                            gamma, block_size, L, W, numel):
    """One (tile_b, W) row-tile of the padded uniform field per grid step.

    u_ref    : (tile_b, W) f32 uniforms; pad slots hold 1.0 (never < gamma),
               equivalent to max_pool1d's zero padding of the 0/1 mask.
    scale_ref: (1, 1) f32 output (resident across the grid; written last step).
    acc_ref  : (1, 1) f32 VMEM scratch -- running count of dropped positions.
    """
    i = pl.program_id(0)

    @pl.when(i == 0)
    def _():
        acc_ref[...] = jnp.zeros_like(acc_ref)

    m = (u_ref[...] < gamma).astype(jnp.float32)

    # Sliding max over a `block_size` window via XLU lane-rolls + log-doubling:
    # ~log2(block_size) maximums instead of block_size-1 unaligned lane slices
    # (each slice would relayout the whole tile through the VALU/load path).
    # roll(x, W - s)[:, j] == x[:, (j + s) % W]; wraparound only corrupts lanes
    # whose dependency window crosses W, i.e. lanes >= W - block_size + 1 > L-1,
    # which never feed the L valid output columns (since W >= L + block_size).
    pooled = m
    span = 1
    while 2 * span <= block_size:
        pooled = jnp.maximum(pooled, pltpu.roll(pooled, shift=W - span, axis=1))
        span *= 2
    rem = block_size - span
    if rem > 0:
        pooled = jnp.maximum(pooled, pltpu.roll(pooled, shift=W - rem, axis=1))

    # Only the first L pooled columns are valid max-pool outputs (this also
    # implements the `[..., :-1]` truncation for even block_size).
    col = jax.lax.broadcasted_iota(jnp.int32, pooled.shape, 1)
    dropped = jnp.sum(jnp.where(col < L, pooled, 0.0))
    acc_ref[...] = acc_ref[...] + dropped

    @pl.when(i == pl.num_programs(0) - 1)
    def _():
        # scale = numel / sum(block_mask).  Faithful to the reference module,
        # which also divides by zero (-> inf) if every position got dropped.
        scale_ref[...] = jnp.float32(numel) / (jnp.float32(numel) - acc_ref[...])


def _dropblock_scale(u, gamma, block_size, L, numel):
    """Cold-path reduction over the (B, L) uniforms -> (1,) f32 scale."""
    B = u.shape[0]
    half = block_size // 2
    W = _round_up(L + block_size, 128)            # lane-aligned padded width

    # ~2 MiB row tiles; the random field is O(B*L), off the hot path, and the
    # default scoped VMEM limit is plenty for these tiles.
    # TODO(synk): for extremely long L (W*4 >> 2 MiB) this should also tile the
    # lane dim with a block_size-1 halo; not needed at feature-backbone sizes.
    tile_b = max(8, min(_round_up(B, 8), ((2 << 20) // (W * 4)) // 8 * 8))
    Bp = _round_up(B, tile_b)                     # exact multiple -> no OOB reads

    # Pad rows and lanes with 1.0: (1.0 < gamma) is always False, so padded
    # slots never contribute a drop.
    u_pad = jnp.pad(u, ((0, Bp - B), (half, W - L - half)), constant_values=1.0)

    kernel = functools.partial(
        _dropblock_scale_kernel, gamma=float(gamma), block_size=int(block_size),
        L=int(L), W=int(W), numel=int(numel))

    scale = pl.pallas_call(
        kernel,
        out_shape=jax.ShapeDtypeStruct((1, 1), jnp.float32),
        grid=(Bp // tile_b,),
        in_specs=[pl.BlockSpec((tile_b, W), lambda i: (i, 0))],
        out_specs=pl.BlockSpec((1, 1), lambda i: (0, 0)),
        scratch_shapes=[pltpu.VMEM((1, 1), jnp.float32)],
        compiler_params=pltpu.CompilerParams(
            dimension_semantics=("arbitrary",)),
    )(u_pad)
    return scale.reshape(1)


# ---------------------------------------------------------------------------
# Phase 2: gridded, pipelined, lane-dense elementwise multiply by the scale.
# ---------------------------------------------------------------------------
def _scale_mul_kernel(s_ref, x_ref, o_ref):
    # s_ref is a (1,) f32 SMEM scalar: no padded (8,128) VMEM tile and no
    # vector load / broadcast per grid step.  Cast to the input dtype so
    # bf16/fp8 inputs multiply natively (halves vreg / vld / vst pressure);
    # this costs one rounding of the scalar for sub-f32 dtypes.
    s = s_ref[0].astype(x_ref.dtype)
    o_ref[...] = x_ref[...] * s


def _tpu_vmem_and_kind():
    vmem = 128 * 1024 * 1024
    kind = ""
    try:
        vmem = int(pltpu.get_tpu_info().vmem_capacity_bytes)
    except Exception:
        pass
    try:
        kind = str(jax.devices()[0].device_kind).lower()
    except Exception:
        pass
    return vmem, kind


def _phase2_block_bytes(vmem_cap, kind):
    # Generation-aware block target (amortizes the ~0.35 us per-grid-step cost
    # against each chip's HBM bandwidth while respecting its VMEM capacity):
    #   v5e (~0.8 TB/s HBM):          2-4 MiB already ~93% roofline -> 4 MiB
    #   v7x (3.2 TB/s/TC, 64 MiB):    6 MiB -> ~24 MiB of double buffers
    #   v6e (1.4 TB/s, 128 MiB VMEM): 8 MiB -> per-step overhead ~3%
    if "v5" in kind:
        return 4 << 20
    if vmem_cap <= (96 << 20):            # v7x-class: 64 MiB VMEM per TensorCore
        return 6 << 20
    return 8 << 20


def _phase2_tiling(R, L, itemsize, sublane, target_bytes):
    bytes_per_row = max(1, L * itemsize)

    if sublane * bytes_per_row > target_bytes:
        # Rows too long to fit even `sublane` of them per block: tile L too, so
        # arbitrarily long sequences stay at the roofline sweet spot and never
        # blow the VMEM budget (especially v7x's 64 MiB).
        tile_l = max(128, (target_bytes // (sublane * itemsize)) // 128 * 128)
        tile_l = min(tile_l, _round_up(L, 128))
        tile_r = R if R < sublane else sublane
    else:
        tile_l = L                                      # lane-dense full rows
        rows = (target_bytes // bytes_per_row) // sublane * sublane
        rows = max(sublane, rows)
        tile_r = R if R <= rows else rows

    n_r = pl.cdiv(R, tile_r)
    n_l = pl.cdiv(L, tile_l)

    # Guarantee >=2 (prefer >=4) grid steps whenever the row count allows it:
    # a single-step grid gets no megacore sharding on v7x and no input/output
    # DMA pipelining anywhere.
    min_steps = 4
    if n_r * n_l < min_steps and R > sublane:
        want_r = -(-min_steps // n_l)                   # ceil
        tile_r = max(sublane, _round_up(-(-R // want_r), sublane))
        n_r = pl.cdiv(R, tile_r)

    return tile_r, tile_l, n_r, n_l


def dropblock1d(x, key, *, drop_prob=0.1, block_size=16, training=True):
    """Pallas implementation of DropBlock1D.forward (x: (B, C, L))."""
    if (not training) or drop_prob == 0.0:
        return x

    B, C, L = x.shape
    gamma = float(drop_prob) / float(block_size) ** 2
    numel = B * L

    # ---- Phase 1: global rescale factor from the (B, L) random field -------
    # TODO(synk): generate the uniforms in-kernel with pltpu.prng_random_bits
    # to drop the extra O(B*L) uniform+pad XLA passes; kept host-side so the
    # numpy cross-check below can replay the exact same random field.
    u = jax.random.uniform(key, (B, L), dtype=jnp.float32)
    scale = _dropblock_scale(u, gamma, block_size, L, numel)      # (1,) f32

    # ---- Phase 2: x * scale, pure HBM-bandwidth streaming pass --------------
    R = B * C
    x2d = x.reshape(R, L)                        # free view; lane dim = L
    itemsize = np.dtype(x.dtype).itemsize
    sublane = max(8, 32 // itemsize)             # f32: 8, bf16: 16, int8/fp8: 32

    vmem_cap, kind = _tpu_vmem_and_kind()
    target = _phase2_block_bytes(vmem_cap, kind)
    tile_r, tile_l, n_r, n_l = _phase2_tiling(R, L, itemsize, sublane, target)

    block_bytes = tile_r * tile_l * itemsize
    vmem_limit = int(min(max(4 * block_bytes + (8 << 20), 32 << 20),
                         vmem_cap * 3 // 4))

    out2d = pl.pallas_call(
        _scale_mul_kernel,
        out_shape=jax.ShapeDtypeStruct((R, L), x.dtype),
        grid=(n_r, n_l),
        in_specs=[
            pl.BlockSpec(memory_space=pltpu.MemorySpace.SMEM),      # scale scalar
            pl.BlockSpec((tile_r, tile_l), lambda i, j: (i, j)),    # x tile
        ],
        out_specs=pl.BlockSpec((tile_r, tile_l), lambda i, j: (i, j)),
        compiler_params=pltpu.CompilerParams(
            dimension_semantics=("parallel", "parallel"),
            vmem_limit_bytes=vmem_limit),
        cost_estimate=pl.CostEstimate(
            flops=R * L, transcendentals=0,
            bytes_accessed=2 * R * L * itemsize + 4),
    )(scale, x2d)

    return out2d.reshape(B, C, L)


# ---------------------------------------------------------------------------
# Pure numpy reference mirroring the PyTorch forward (training mode).
# ---------------------------------------------------------------------------
def _reference(x_f32, u, drop_prob, block_size):
    B, C, L = x_f32.shape
    gamma = drop_prob / block_size ** 2
    mask = (u < gamma).astype(np.float32)                # (B, L)
    p = block_size // 2
    padded = np.pad(mask, ((0, 0), (p, p)))
    out_len = L + 2 * p - block_size + 1
    pooled = np.stack(
        [padded[:, i:i + block_size].max(axis=1) for i in range(out_len)],
        axis=1)
    if block_size % 2 == 0:
        pooled = pooled[:, :-1]
    block_mask = 1.0 - pooled
    scale = block_mask.size / block_mask.sum()
    return x_f32 * scale


if __name__ == "__main__":
    root = jax.random.PRNGKey(0)

    cases = [
        dict(B=2, C=4, L=128, drop_prob=0.1, block_size=16, dtype=jnp.float32,
             rtol=1e-5, atol=1e-5),                       # module defaults
        dict(B=2, C=4, L=256, drop_prob=0.6, block_size=4, dtype=jnp.float32,
             rtol=1e-5, atol=1e-5),                       # actually drops
        dict(B=2, C=3, L=200, drop_prob=0.5, block_size=5, dtype=jnp.float32,
             rtol=1e-5, atol=1e-5),                       # odd block, L % 128 != 0
        dict(B=4, C=8, L=512, drop_prob=0.3, block_size=16, dtype=jnp.float32,
             rtol=1e-5, atol=1e-5),                       # multi-step phase-2 grid
        dict(B=2, C=8, L=256, drop_prob=0.6, block_size=4, dtype=jnp.bfloat16,
             rtol=2e-2, atol=1e-2),                       # low-precision input
    ]
    for i, cfg in enumerate(cases):
        kx, km = jax.random.split(jax.random.fold_in(root, i))
        x = jax.random.normal(kx, (cfg["B"], cfg["C"], cfg["L"]),
                              dtype=cfg["dtype"])
        out = dropblock1d(x, km, drop_prob=cfg["drop_prob"],
                          block_size=cfg["block_size"], training=True)
        out = jax.block_until_ready(out)

        # Cross-check against numpy using the same uniforms.
        u_np = np.asarray(jax.random.uniform(km, (cfg["B"], cfg["L"]),
                                             dtype=jnp.float32))
        ref = _reference(np.asarray(x.astype(jnp.float32)), u_np,
                         cfg["drop_prob"], cfg["block_size"])
        np.testing.assert_allclose(np.asarray(out.astype(jnp.float32)), ref,
                                   rtol=cfg["rtol"], atol=cfg["atol"])

    # Eval mode / drop_prob == 0 passthrough.
    x = jax.random.normal(jax.random.PRNGKey(1), (2, 4, 128), dtype=jnp.float32)
    out_eval = dropblock1d(x, jax.random.PRNGKey(2), training=False)
    np.testing.assert_allclose(np.asarray(out_eval), np.asarray(x))

    print("KERNEL_OK")
</pallas_src>

<mosaic_0001>
module attributes {stable_mosaic.version = 11 : i64} {
  func.func @_dropblock_scale_kernel(%arg0: i32, %arg1: memref<8x256xf32, #tpu.memory_space<vmem>>, %arg2: memref<1x1xf32, #tpu.memory_space<vmem>>, %arg3: memref<1x1xf32, #tpu.memory_space<vmem>>) attributes {dimension_semantics = [#tpu.dimension_semantics<arbitrary>], iteration_bounds = array<i64: 1>, scalar_prefetch = 0 : i64, scratch_operands = 1 : i64, tpu.core_type = #tpu.core_type<tc>, window_params = [{transform_indices = @transform_0, window_bounds = array<i64: 8, 256>}, {pipeline_mode = #tpu.pipeline_mode<synchronous>, transform_indices = @transform_1, window_bounds = array<i64: 1, 1>}]} {
    %c0_i32 = arith.constant 0 : i32
    %0 = arith.cmpi eq, %arg0, %c0_i32 : i32
    %1 = arith.extui %0 : i1 to i32
    %c0_i32_0 = arith.constant 0 : i32
    %2 = arith.cmpi ne, %1, %c0_i32_0 : i32
    scf.if %2 {
      %cst_10 = arith.constant 0.000000e+00 : f32
      %32 = vector.broadcast %cst_10 : f32 to vector<1x1xf32>
      %c0_11 = arith.constant 0 : index
      %c0_12 = arith.constant 0 : index
      %33 = vector.load %arg3[%c0_11, %c0_12] : memref<1x1xf32, #tpu.memory_space<vmem>>, vector<1x1xf32>
      tpu.vector_store %arg3[%c0_11, %c0_12], %32 {strides = array<i32>} : memref<1x1xf32, #tpu.memory_space<vmem>>, vector<1x1xf32>,
    } else {
    }
    %c0 = arith.constant 0 : index
    %c0_1 = arith.constant 0 : index
    %3 = vector.load %arg1[%c0, %c0_1] : memref<8x256xf32, #tpu.memory_space<vmem>>, vector<8x256xf32>
    %cst = arith.constant 3.906250e-04 : f32
    %4 = vector.broadcast %cst : f32 to vector<8x256xf32>
    %5 = arith.cmpf olt, %3, %4 : vector<8x256xf32>
    %6 = arith.extui %5 : vector<8x256xi1> to vector<8x256xi32>
    %7 = arith.sitofp %6 : vector<8x256xi32> to vector<8x256xf32>
    %c255_i32 = arith.constant 255 : i32
    %8 = tpu.dynamic_rotate %7 by %c255_i32 dim 1 : vector<8x256xf32>, i32 -> vector<8x256xf32>
    %9 = arith.maximumf %7, %8 : vector<8x256xf32>
    %c254_i32 = arith.constant 254 : i32
    %10 = tpu.dynamic_rotate %9 by %c254_i32 dim 1 : vector<8x256xf32>, i32 -> vector<8x256xf32>
    %11 = arith.maximumf %9, %10 : vector<8x256xf32>
    %c252_i32 = arith.constant 252 : i32
    %12 = tpu.dynamic_rotate %11 by %c252_i32 dim 1 : vector<8x256xf32>, i32 -> vector<8x256xf32>
    %13 = arith.maximumf %11, %12 : vector<8x256xf32>
    %c248_i32 = arith.constant 248 : i32
    %14 = tpu.dynamic_rotate %13 by %c248_i32 dim 1 : vector<8x256xf32>, i32 -> vector<8x256xf32>
    %15 = arith.maximumf %13, %14 : vector<8x256xf32>
    %16 = tpu.iota {dimensions = array<i32: 1>} : vector<8x256xi32>
    %c128_i32 = arith.constant 128 : i32
    %17 = vector.broadcast %c128_i32 : i32 to vector<8x256xi32>
    %18 = arith.cmpi slt, %16, %17 : vector<8x256xi32>
    %cst_2 = arith.constant 0.000000e+00 : f32
    %19 = vector.broadcast %cst_2 : f32 to vector<8x256xf32>
    %20 = arith.select %18, %15, %19 : vector<8x256xi1>, vector<8x256xf32>
    %21 = vector.shape_cast %20 : vector<8x256xf32> to vector<1x8x256xf32>
    %cst_3 = arith.constant dense<0.000000e+00> : vector<1xf32>
    %22 = vector.multi_reduction <add>, %21, %cst_3 [1, 2] : vector<1x8x256xf32> to vector<1xf32>
    %23 = vector.shape_cast %22 : vector<1xf32> to vector<1x1x1xf32>
    %24 = vector.extract %23[0, 0, 0] : f32 from vector<1x1x1xf32>
    %c0_4 = arith.constant 0 : index
    %c0_5 = arith.constant 0 : index
    %25 = vector.load %arg3[%c0_4, %c0_5] : memref<1x1xf32, #tpu.memory_space<vmem>>, vector<1x1xf32>
    %26 = vector.broadcast %24 : f32 to vector<1x1xf32>
    %27 = arith.addf %25, %26 : vector<1x1xf32>
    %c0_6 = arith.constant 0 : index
    %c0_7 = arith.constant 0 : index
    %28 = vector.load %arg3[%c0_6, %c0_7] : memref<1x1xf32, #tpu.memory_space<vmem>>, vector<1x1xf32>
    tpu.vector_store %arg3[%c0_6, %c0_7], %27 {strides = array<i32>} : memref<1x1xf32, #tpu.memory_space<vmem>>, vector<1x1xf32>,
    %c0_i32_8 = arith.constant 0 : i32
    %29 = arith.cmpi eq, %arg0, %c0_i32_8 : i32
    %30 = arith.extui %29 : i1 to i32
    %c0_i32_9 = arith.constant 0 : i32
    %31 = arith.cmpi ne, %30, %c0_i32_9 : i32
    scf.if %31 {
      %c0_10 = arith.constant 0 : index
      %c0_11 = arith.constant 0 : index
      %32 = vector.load %arg3[%c0_10, %c0_11] : memref<1x1xf32, #tpu.memory_space<vmem>>, vector<1x1xf32>
      %cst_12 = arith.constant 2.560000e+02 : f32
      %33 = vector.broadcast %cst_12 : f32 to vector<1x1xf32>
      %34 = arith.subf %33, %32 : vector<1x1xf32>
      %cst_13 = arith.constant 2.560000e+02 : f32
      %35 = vector.broadcast %cst_13 : f32 to vector<1x1xf32>
      %36 = arith.divf %35, %34 : vector<1x1xf32>
      %c0_14 = arith.constant 0 : index
      %c0_15 = arith.constant 0 : index
      %37 = vector.load %arg2[%c0_14, %c0_15] : memref<1x1xf32, #tpu.memory_space<vmem>>, vector<1x1xf32>
      tpu.vector_store %arg2[%c0_14, %c0_15], %36 {strides = array<i32>} : memref<1x1xf32, #tpu.memory_space<vmem>>, vector<1x1xf32>,
    } else {
    }
    return
  }
  func.func @transform_0(%arg0: i32) -> (i32, i32) {
    %c0_i32 = arith.constant 0 : i32
    %c0_i32_0 = arith.constant 0 : i32
    return %arg0, %c0_i32 : i32, i32
  }
  func.func @transform_1(%arg0: i32) -> (i32, i32) {
    %c0_i32 = arith.constant 0 : i32
    %c0_i32_0 = arith.constant 0 : i32
    %c0_i32_1 = arith.constant 0 : i32
    return %c0_i32, %c0_i32_0 : i32, i32
  }
}

</mosaic_0001>

<llo_original>
// kernel: tpu_custom_call.1
$region0: #{tpu_custom_call.1}
  #allocation0 [shape = 'u32[]', space=smem, size = 0x4, offset = 0x4, fixed_abs, tag = 'smem constant byte address 0x4 - core index']
  #allocation1 [shape = 'u32[144,128]{1,0:T(1,128)}', space=vmem, size = 0x12000, scoped, tag = 'internal scratch']
  #allocation2 [shape = 'f32[1,1]{1,0:T(1,128)}', space=vmem, size = 0x200, scoped, tag = 'scratch operand']
  %s0 = inlined_call_operand.hbm [shape: f32[8,256], index: 0, kind: input, shape index: {}]
  %s1 = inlined_call_operand.hbm [shape: f32[1,1], index: 1, kind: output, shape index: {}]
  %s2 = sld [smem:[#allocation0]]
  $region26: #{tpu_custom_call.1} parent=0
    _
  %s4 = ssub.s32 1, %s2
  %s5 = scalar_select 0, %s4, %s2
  $region1: #{tpu_custom_call.1} parent=0
    #allocation3 [shape = 'u8[8192]{0}', space=vmem, size = 0x2000, scoped, tag = 'input window, operand 0, single buffered']
    #allocation4 [shape = 's32[1]{0}', space=sflag, size = 0x4, scoped, tag = 'scoped memory for tpu_custom_call.1']
    #allocation5 [shape = 's32[1]{0}', space=sflag, size = 0x4, scoped, tag = 'scoped memory for tpu_custom_call.1']
    #allocation6 [shape = 'u8[512]{0}', space=vmem, size = 0x400, scoped, tag = 'output window, operand 0, single buffered']
    %6 = vsyncpa [#allocation4], 0
    %7 = vsyncpa [#allocation5], 0
    // Predicated region
    $region2: #{tpu_custom_call.1} parent=1 // pred_check
      _
    $region3: #{tpu_custom_call.1} parent=1 // pred_check_branch
      %9 = sbr.rel (0) target = $region5
    $region4: #{tpu_custom_call.1} parent=1 // pred_region
      %s11 = ssub.s32 256, 256
      %12 = vsyncadd [#allocation4], %s11
      %s14 = sshll.u32 [#allocation3], 4
      %s15 = int_to_ptr.vmem [resolvable:$true] %s14
      %17 = dma.hbm_to_vmem [thread:$0]  %s0, 256, %s15, [#allocation4]
    $region5: #{tpu_custom_call.1} parent=1 // pred_fallthru
      _
    // Predicated region
    $region6: #{tpu_custom_call.1} parent=1 // pred_check
      _
    $region7: #{tpu_custom_call.1} parent=1 // pred_check_branch
      %19 = sbr.rel (0) target = $region9
    $region8: #{tpu_custom_call.1} parent=1 // pred_region
      %20 = dma.done [#allocation4], 256
    $region9: #{tpu_custom_call.1} parent=1 // pred_fallthru
      _
    %p21 = scmp.eq.s32.totalorder 0, 0
    // Predicated region
    $region10: #{tpu_custom_call.1} parent=1 // pred_check
      %p22 = pneg %p21
    $region11: #{tpu_custom_call.1} parent=1 // pred_check_branch
      %24 = sbr.rel (%p22) target = $region13
    $region12: #{tpu_custom_call.1} parent=1 // pred_region
      %vm25 = vcmask 0
      %26 = vst.msk [vmem:[#allocation2] sm:$0x1] %vm25, 0.0
    $region13: #{tpu_custom_call.1} parent=1 // pred_fallthru
      _
    %v27 = vld [vmem:[#allocation3] sm:$0xff]
    %v28 = vld [vmem:[#allocation3 + $0x8] sm:$0xff]
    %vm29 = vcmp.lt.f32.partialorder %v27, 0.000390625
    %vm30 = vcmp.lt.f32.partialorder %v28, 0.000390625
    %v31 = vsel %vm29, 1, 0
    %v32 = vsel %vm30, 1, 0
    %v33 = vcvt.s32.f32 %v31
    %v34 = vcvt.s32.f32 %v32
    %35 = vrot.lane.b32.xlu0 %v33, 127
    %v36 = vpop.permute.xlu0 %35
    %37 = vrot.lane.b32.xlu0 %v34, 127
    %v38 = vpop.permute.xlu0 %37
    %v39 = vlaneseq
    %v40 = vand.u32 %v39, 127
    %vm41 = vcmp.lt.s32.totalorder %v40, 127
    %v42 = vsel %vm41, %v36, %v38
    %v43 = vsel %vm41, %v38, %v36
    %v44 = vmax.f32 %v33, %v42
    %v45 = vmax.f32 %v34, %v43
    %46 = vrot.lane.b32.xlu0 %v44, 126
    %v47 = vpop.permute.xlu0 %46
    %48 = vrot.lane.b32.xlu0 %v45, 126
    %v49 = vpop.permute.xlu0 %48
    %vm50 = vcmp.lt.s32.totalorder %v40, 126
    %v51 = vsel %vm50, %v47, %v49
    %v52 = vsel %vm50, %v49, %v47
    %v53 = vmax.f32 %v44, %v51
    %v54 = vmax.f32 %v45, %v52
    %55 = vrot.lane.b32.xlu0 %v53, 124
    %v56 = vpop.permute.xlu0 %55
    %57 = vrot.lane.b32.xlu0 %v54, 124
    %v58 = vpop.permute.xlu0 %57
    %vm59 = vcmp.lt.s32.totalorder %v40, 124
    %v60 = vsel %vm59, %v56, %v58
    %v61 = vsel %vm59, %v58, %v56
    %v62 = vmax.f32 %v53, %v60
    %v63 = vmax.f32 %v54, %v61
    %64 = vrot.lane.b32.xlu0 %v62, 120
    %v65 = vpop.permute.xlu0 %64
    %66 = vrot.lane.b32.xlu0 %v63, 120
    %v67 = vpop.permute.xlu0 %66
    %vm68 = vcmp.lt.s32.totalorder %v40, 120
    %v69 = vsel %vm68, %v65, %v67
    %v70 = vsel %vm68, %v67, %v65
    %v71 = vmax.f32 %v62, %v69
    %v72 = vmax.f32 %v63, %v70
    %v73 = vadd.s32 %v40, 128
    %vm74 = vcmp.lt.s32.totalorder %v40, 128
    %vm75 = vcmp.lt.s32.totalorder %v73, 128
    %v76 = vsel %vm74, %v71, 0.0
    %v77 = vsel %vm75, %v72, 0.0
    %v78 = vadd.f32 %v76, %v77
    %79 = vadd.xlane.f32.xlu0 %v78
    %v80 = vpop.xlane.xlu0 %79
    %v81 = vrot.slane %v80, 4
    %v82 = vadd.f32 %v80, %v81
    %v83 = vrot.slane %v82, 2
    %v84 = vadd.f32 %v82, %v83
    %v85 = vrot.slane %v84, 1
    %v86 = vadd.f32 %v84, %v85
    %s87 = vtos %v86
    %v88 = vld [vmem:[#allocation2] sm:$0x1]
    %v89 = vstv %s87
    %v90 = vadd.f32 %v88, %v89
    %vm91 = vcmask 0
    %92 = vst.msk [vmem:[#allocation2] sm:$0x1] %vm91, %v90
    // Predicated region
    $region14: #{tpu_custom_call.1} parent=1 // pred_check
      %p93 = pneg %p21
    $region15: #{tpu_custom_call.1} parent=1 // pred_check_branch
      %95 = sbr.rel (%p93) target = $region17
    $region16: #{tpu_custom_call.1} parent=1 // pred_region
      %v96 = vld [vmem:[#allocation2] sm:$0x1]
      %v97 = vsub.f32 256.0, %v96
      %v98 = vrcp.pop %v97
      %v99 = vmul.f32 256.0, %v98
      %100 = vst.msk [vmem:[#allocation6] sm:$0x1] %vm91, %v99
    $region17: #{tpu_custom_call.1} parent=1 // pred_fallthru
      _
    // Predicated region
    $region18: #{tpu_custom_call.1} parent=1 // pred_check
      _
    $region19: #{tpu_custom_call.1} parent=1 // pred_check_branch
      %102 = sbr.rel (0) target = $region21
    $region20: #{tpu_custom_call.1} parent=1 // pred_region
      %s104 = ssub.s32 16, 16
      %105 = vsyncadd [#allocation5], %s104
      %s107 = sshll.u32 [#allocation6], 4
      %s108 = int_to_ptr.vmem [resolvable:$true] %s107
      %110 = dma.vmem_to_hbm [thread:$0]  %s108, 16, %s1, [#allocation5]
    $region21: #{tpu_custom_call.1} parent=1 // pred_fallthru
      _
    // Predicated region
    $region22: #{tpu_custom_call.1} parent=1 // pred_check
      _
    $region23: #{tpu_custom_call.1} parent=1 // pred_check_branch
      %112 = sbr.rel (0) target = $region25
    $region24: #{tpu_custom_call.1} parent=1 // pred_region
      %113 = dma.done [#allocation5], 16
    $region25: #{tpu_custom_call.1} parent=1 // pred_fallthru
      _
    %114 = vsyncpa [#allocation4], 1
    %115 = vsyncpa [#allocation5], 1

</llo_original>
